<compile_context>
chip_gen: v7x
topology: tpu7x:2x2x1
jax: 0.10.0
libtpu: 0.0.40
codegen_flags: <defaults>
</compile_context>

<pallas_src>
import numpy as np
import jax
import jax.numpy as jnp
from jax.experimental import pallas as pl
from jax.experimental.pallas import tpu as pltpu


def _round_up(n, m):
    return ((n + m - 1) // m) * m


# ----------------------------------------------------------------------------
# Fused FFN kernel (F-tiled reduction):
#   acc_i = sum_j relu(x_i @ W1[:, j] + b1[j]) @ W2[j, :] ;  y_i = acc_i + b2
# ----------------------------------------------------------------------------
def ffn_kernel(x_ref, w1_ref, b1_ref, w2_ref, b2_ref, o_ref, acc_ref):
    j = pl.program_id(1)

    @pl.when(j == 0)
    def _init():
        acc_ref[...] = jnp.zeros_like(acc_ref)

    cdt = w1_ref.dtype  # MXU compute dtype (bf16 by default)
    # First matmul on the MXU with f32 accumulation; bias + ReLU epilogue in f32.
    h = jnp.dot(x_ref[...].astype(cdt), w1_ref[...],
                preferred_element_type=jnp.float32)
    h = jnp.maximum(h + b1_ref[...], 0.0)
    # TODO(synk): nn.Dropout(p=0.1) is identity at inference (eval mode);
    # training-mode stochastic dropout (pltpu.prng_*) is not implemented here.
    acc_ref[...] += jnp.dot(h.astype(cdt), w2_ref[...],
                            preferred_element_type=jnp.float32)

    @pl.when(j == pl.num_programs(1) - 1)
    def _finalize():
        o_ref[...] = (acc_ref[...] + b2_ref[...]).astype(o_ref.dtype)


def prepare_ffn_params(w1, b1, w2, b2, *, compute_dtype=jnp.bfloat16,
                       d_ff_block=512):
    """One-time parameter prep (do NOT call per forward pass):
    cast weights to the MXU compute dtype and zero-pad d_ff to a multiple of
    the d_ff tile.  Zero padding of W1 cols / b1 / W2 rows contributes exactly
    zero through relu(x @ 0 + 0) @ 0, so results are unchanged."""
    D, F = w1.shape
    tf = _round_up(min(F, d_ff_block), 128)
    F_pad = _round_up(F, tf)
    if F_pad != F:
        w1 = jnp.pad(w1, ((0, 0), (0, F_pad - F)))
        b1 = jnp.pad(b1, ((0, F_pad - F),))
        w2 = jnp.pad(w2, ((0, F_pad - F), (0, 0)))
    return {
        "w1": w1.astype(compute_dtype),
        "b1": b1.reshape(1, F_pad).astype(jnp.float32),
        "w2": w2.astype(compute_dtype),
        "b2": b2.reshape(1, D).astype(jnp.float32),
        "d_model": D,
        "d_ff_padded": F_pad,
        "tf": tf,
    }


def positionwise_feed_forward(x, params, *, max_block_rows=256, out_dtype=None):
    """Applies w_2(relu(w_1(x))) over the last dim of x with one pallas_call."""
    D = params["d_model"]
    F_pad = params["d_ff_padded"]
    tf = params["tf"]
    w1, b1, w2, b2 = params["w1"], params["b1"], params["w2"], params["b2"]

    orig_shape = x.shape
    assert orig_shape[-1] == D, "last dim of x must equal d_model"
    out_dtype = x.dtype if out_dtype is None else out_dtype
    R = int(np.prod(orig_shape[:-1]))
    if R == 0:
        return jnp.zeros(orig_shape, out_dtype)
    xf = x.reshape(R, D)

    # Row tile: 16-aligned (bf16 sublane packing), capped at max_block_rows.
    # If the whole problem fits one block but can be split, use >=2 row blocks
    # so the "parallel" grid axis shards across v7x's two TensorCores.
    tm = min(max_block_rows, _round_up(R, 16))
    if R > 16 and pl.cdiv(R, tm) < 2:
        tm = max(16, _round_up(pl.cdiv(R, 2), 16))
    n_rows = pl.cdiv(R, tm)          # ragged last block handled by Pallas masking
    n_f = F_pad // tf
    grid = (n_rows, n_f)

    # Explicit scoped-VMEM budget (defaults 16/32 MiB are far below physical).
    in_b = np.dtype(x.dtype).itemsize
    w_b = np.dtype(w1.dtype).itemsize
    out_b = np.dtype(out_dtype).itemsize
    vmem_bytes = (
        2 * tm * D * in_b            # x tile, double-buffered
        + 2 * D * tf * w_b           # W1 tile, double-buffered
        + 2 * tf * D * w_b           # W2 tile, double-buffered
        + 2 * tf * 4 + 2 * D * 4     # biases
        + 2 * tm * D * out_b         # out tile, double-buffered
        + tm * D * 4                 # f32 accumulator scratch
        + tm * tf * (4 + w_b)        # h intermediate (f32 + compute dtype)
    )
    vmem_limit = int(min(56 * 1024 * 1024,
                         max(32 * 1024 * 1024,
                             int(vmem_bytes * 1.5) + (2 << 20))))

    out = pl.pallas_call(
        ffn_kernel,
        out_shape=jax.ShapeDtypeStruct((R, D), out_dtype),
        grid=grid,
        in_specs=[
            pl.BlockSpec((tm, D), lambda i, j: (i, 0)),    # x rows
            pl.BlockSpec((D, tf), lambda i, j: (0, j)),    # W1 d_ff tile
            pl.BlockSpec((1, tf), lambda i, j: (0, j)),    # b1 d_ff tile
            pl.BlockSpec((tf, D), lambda i, j: (j, 0)),    # W2 d_ff tile
            pl.BlockSpec((1, D), lambda i, j: (0, 0)),     # b2 (grid-invariant)
        ],
        out_specs=pl.BlockSpec((tm, D), lambda i, j: (i, 0)),
        scratch_shapes=[pltpu.VMEM((tm, D), jnp.float32)],
        compiler_params=pltpu.CompilerParams(
            dimension_semantics=("parallel", "arbitrary"),
            vmem_limit_bytes=vmem_limit,
        ),
    )(xf, w1, b1, w2, b2)

    return out.reshape(orig_shape)


if __name__ == "__main__":
    # Small shapes consistent with the module; D multiple of 128 -> lane-dense
    # output store, F multiple of 128 -> single d_ff tile here.
    B, T, D, F = 2, 8, 128, 256

    key = jax.random.PRNGKey(0)
    kx, k1, k2, k3, k4 = jax.random.split(key, 5)
    x = jax.random.normal(kx, (B, T, D), jnp.float32)
    w1 = 0.02 * jax.random.normal(k1, (D, F), jnp.float32)   # == torch w_1.weight.T
    b1 = 0.01 * jax.random.normal(k2, (F,), jnp.float32)
    w2 = 0.02 * jax.random.normal(k3, (F, D), jnp.float32)   # == torch w_2.weight.T
    b2 = 0.01 * jax.random.normal(k4, (D,), jnp.float32)

    params = prepare_ffn_params(w1, b1, w2, b2)   # one-time cast / pad
    y = positionwise_feed_forward(x, params)
    y = jax.block_until_ready(y)
    assert y.shape == (B, T, D) and y.dtype == x.dtype

    # Reference (fp32, eval-mode dropout = identity); loose tol for bf16 MXU path.
    ref = jnp.maximum(x @ w1 + b1, 0.0) @ w2 + b2
    np.testing.assert_allclose(np.asarray(y), np.asarray(ref), atol=2e-2, rtol=2e-2)

    print("KERNEL_OK")
</pallas_src>

<mosaic_0001>
module attributes {stable_mosaic.version = 11 : i64} {
  func.func @ffn_kernel(%arg0: i32, %arg1: i32, %arg2: memref<16x128xf32, #tpu.memory_space<vmem>>, %arg3: memref<128x256xbf16, #tpu.memory_space<vmem>>, %arg4: memref<1x256xf32, #tpu.memory_space<vmem>>, %arg5: memref<256x128xbf16, #tpu.memory_space<vmem>>, %arg6: memref<1x128xf32, #tpu.memory_space<vmem>>, %arg7: memref<16x128xf32, #tpu.memory_space<vmem>>, %arg8: memref<16x128xf32, #tpu.memory_space<vmem>>) attributes {dimension_semantics = [#tpu.dimension_semantics<parallel>, #tpu.dimension_semantics<arbitrary>], iteration_bounds = array<i64: 1, 1>, scalar_prefetch = 0 : i64, scratch_operands = 1 : i64, tpu.core_type = #tpu.core_type<tc>, window_params = [{transform_indices = @transform_0, window_bounds = array<i64: 16, 128>}, {transform_indices = @transform_1, window_bounds = array<i64: 128, 256>}, {transform_indices = @transform_2, window_bounds = array<i64: 1, 256>}, {transform_indices = @transform_3, window_bounds = array<i64: 256, 128>}, {pipeline_mode = #tpu.pipeline_mode<synchronous>, transform_indices = @transform_4, window_bounds = array<i64: 1, 128>}, {transform_indices = @transform_5, window_bounds = array<i64: 16, 128>}]} {
    %c0_i32 = arith.constant 0 : i32
    %0 = arith.cmpi eq, %arg1, %c0_i32 : i32
    %1 = arith.extui %0 : i1 to i32
    %c0_i32_0 = arith.constant 0 : i32
    %2 = arith.cmpi ne, %1, %c0_i32_0 : i32
    scf.if %2 {
      %cst_16 = arith.constant 0.000000e+00 : f32
      %21 = vector.broadcast %cst_16 : f32 to vector<16x128xf32>
      %c0_17 = arith.constant 0 : index
      %c0_18 = arith.constant 0 : index
      %22 = vector.load %arg8[%c0_17, %c0_18] : memref<16x128xf32, #tpu.memory_space<vmem>>, vector<16x128xf32>
      tpu.vector_store %arg8[%c0_17, %c0_18], %21 {strides = array<i32>} : memref<16x128xf32, #tpu.memory_space<vmem>>, vector<16x128xf32>,
    } else {
    }
    %c0 = arith.constant 0 : index
    %c0_1 = arith.constant 0 : index
    %3 = vector.load %arg2[%c0, %c0_1] : memref<16x128xf32, #tpu.memory_space<vmem>>, vector<16x128xf32>
    %4 = arith.truncf %3 : vector<16x128xf32> to vector<16x128xbf16>
    %c0_2 = arith.constant 0 : index
    %c0_3 = arith.constant 0 : index
    %5 = vector.load %arg3[%c0_2, %c0_3] : memref<128x256xbf16, #tpu.memory_space<vmem>>, vector<128x256xbf16>
    %cst = arith.constant dense<0.000000e+00> : vector<16x256xf32>
    %6 = tpu.matmul %4, %5, %cst {dimension_numbers = #tpu.dot_dimension_numbers<[1], [0], [0], [1], [0, 0, 1, 1], [], []>} : vector<16x128xbf16>, vector<128x256xbf16>, vector<16x256xf32> -> vector<16x256xf32>
    %c0_4 = arith.constant 0 : index
    %c0_5 = arith.constant 0 : index
    %7 = vector.load %arg4[%c0_4, %c0_5] : memref<1x256xf32, #tpu.memory_space<vmem>>, vector<1x256xf32>
    %8 = vector.broadcast %7 : vector<1x256xf32> to vector<16x256xf32>
    %9 = arith.addf %6, %8 : vector<16x256xf32>
    %cst_6 = arith.constant 0.000000e+00 : f32
    %10 = vector.broadcast %cst_6 : f32 to vector<16x256xf32>
    %11 = arith.maximumf %9, %10 : vector<16x256xf32>
    %c0_7 = arith.constant 0 : index
    %c0_8 = arith.constant 0 : index
    %12 = vector.load %arg8[%c0_7, %c0_8] : memref<16x128xf32, #tpu.memory_space<vmem>>, vector<16x128xf32>
    %13 = arith.truncf %11 : vector<16x256xf32> to vector<16x256xbf16>
    %c0_9 = arith.constant 0 : index
    %c0_10 = arith.constant 0 : index
    %14 = vector.load %arg5[%c0_9, %c0_10] : memref<256x128xbf16, #tpu.memory_space<vmem>>, vector<256x128xbf16>
    %cst_11 = arith.constant dense<0.000000e+00> : vector<16x128xf32>
    %15 = tpu.matmul %13, %14, %cst_11 {dimension_numbers = #tpu.dot_dimension_numbers<[1], [0], [0], [1], [0, 0, 1, 1], [], []>} : vector<16x256xbf16>, vector<256x128xbf16>, vector<16x128xf32> -> vector<16x128xf32>
    %16 = arith.addf %12, %15 : vector<16x128xf32>
    %c0_12 = arith.constant 0 : index
    %c0_13 = arith.constant 0 : index
    %17 = vector.load %arg8[%c0_12, %c0_13] : memref<16x128xf32, #tpu.memory_space<vmem>>, vector<16x128xf32>
    tpu.vector_store %arg8[%c0_12, %c0_13], %16 {strides = array<i32>} : memref<16x128xf32, #tpu.memory_space<vmem>>, vector<16x128xf32>,
    %c0_i32_14 = arith.constant 0 : i32
    %18 = arith.cmpi eq, %arg1, %c0_i32_14 : i32
    %19 = arith.extui %18 : i1 to i32
    %c0_i32_15 = arith.constant 0 : i32
    %20 = arith.cmpi ne, %19, %c0_i32_15 : i32
    scf.if %20 {
      %c0_16 = arith.constant 0 : index
      %c0_17 = arith.constant 0 : index
      %21 = vector.load %arg8[%c0_16, %c0_17] : memref<16x128xf32, #tpu.memory_space<vmem>>, vector<16x128xf32>
      %c0_18 = arith.constant 0 : index
      %c0_19 = arith.constant 0 : index
      %22 = vector.load %arg6[%c0_18, %c0_19] : memref<1x128xf32, #tpu.memory_space<vmem>>, vector<1x128xf32>
      %23 = vector.broadcast %22 : vector<1x128xf32> to vector<16x128xf32>
      %24 = arith.addf %21, %23 : vector<16x128xf32>
      %c0_20 = arith.constant 0 : index
      %c0_21 = arith.constant 0 : index
      %25 = vector.load %arg7[%c0_20, %c0_21] : memref<16x128xf32, #tpu.memory_space<vmem>>, vector<16x128xf32>
      tpu.vector_store %arg7[%c0_20, %c0_21], %24 {strides = array<i32>} : memref<16x128xf32, #tpu.memory_space<vmem>>, vector<16x128xf32>,
    } else {
    }
    return
  }
  func.func @transform_0(%arg0: i32, %arg1: i32) -> (i32, i32) {
    %c0_i32 = arith.constant 0 : i32
    %c0_i32_0 = arith.constant 0 : i32
    return %arg0, %c0_i32 : i32, i32
  }
  func.func @transform_1(%arg0: i32, %arg1: i32) -> (i32, i32) {
    %c0_i32 = arith.constant 0 : i32
    %c0_i32_0 = arith.constant 0 : i32
    return %c0_i32, %arg1 : i32, i32
  }
  func.func @transform_2(%arg0: i32, %arg1: i32) -> (i32, i32) {
    %c0_i32 = arith.constant 0 : i32
    %c0_i32_0 = arith.constant 0 : i32
    return %c0_i32, %arg1 : i32, i32
  }
  func.func @transform_3(%arg0: i32, %arg1: i32) -> (i32, i32) {
    %c0_i32 = arith.constant 0 : i32
    %c0_i32_0 = arith.constant 0 : i32
    return %arg1, %c0_i32 : i32, i32
  }
  func.func @transform_4(%arg0: i32, %arg1: i32) -> (i32, i32) {
    %c0_i32 = arith.constant 0 : i32
    %c0_i32_0 = arith.constant 0 : i32
    %c0_i32_1 = arith.constant 0 : i32
    return %c0_i32, %c0_i32_0 : i32, i32
  }
  func.func @transform_5(%arg0: i32, %arg1: i32) -> (i32, i32) {
    %c0_i32 = arith.constant 0 : i32
    %c0_i32_0 = arith.constant 0 : i32
    return %arg0, %c0_i32 : i32, i32
  }
}

</mosaic_0001>

<llo_original>
// kernel: tpu_custom_call.1
$region0: #{tpu_custom_call.1}
  #allocation0 [shape = 'u32[]', space=smem, size = 0x4, offset = 0x4, fixed_abs, tag = 'smem constant byte address 0x4 - core index']
  #allocation1 [shape = 'u32[144,128]{1,0:T(1,128)}', space=vmem, size = 0x12000, scoped, tag = 'internal scratch']
  #allocation2 [shape = 'f32[16,128]{1,0:T(8,128)}', space=vmem, size = 0x2000, scoped, tag = 'scratch operand']
  %s0 = inlined_call_operand.hbm [shape: f32[16,128], index: 0, kind: input, shape index: {}]
  %s1 = inlined_call_operand.hbm [shape: bf16[128,256], index: 1, kind: input, shape index: {}]
  %s2 = inlined_call_operand.vmem [shape: f32[1,256], index: 2, kind: input, shape index: {}]
  %s3 = inlined_call_operand.hbm [shape: bf16[256,128], index: 3, kind: input, shape index: {}]
  %s4 = inlined_call_operand.vmem [shape: f32[1,128], index: 4, kind: input, shape index: {}]
  %s5 = inlined_call_operand.hbm [shape: f32[16,128], index: 5, kind: output, shape index: {}]
  %s6 = sld [smem:[#allocation0]]
  $region50: #{tpu_custom_call.1} parent=0
    _
  %s8 = ssub.s32 1, %s6
  %s9 = scalar_select 0, %s8, %s6
  $region1: #{tpu_custom_call.1} parent=0
    #allocation3 [shape = 'u8[8192]{0}', space=vmem, size = 0x2000, scoped, tag = 'input window, operand 0, single buffered']
    #allocation4 [shape = 's32[1]{0}', space=sflag, size = 0x4, scoped, tag = 'scoped memory for tpu_custom_call.1']
    #allocation5 [shape = 's32[1]{0}', space=sflag, size = 0x4, scoped, tag = 'scoped memory for tpu_custom_call.1']
    #allocation6 [shape = 'u8[65536]{0}', space=vmem, size = 0x10000, scoped, tag = 'input window, operand 1, single buffered']
    #allocation7 [shape = 's32[1]{0}', space=sflag, size = 0x4, scoped, tag = 'scoped memory for tpu_custom_call.1']
    #allocation8 [shape = 'u8[65536]{0}', space=vmem, size = 0x10000, scoped, tag = 'input window, operand 3, single buffered']
    #allocation9 [shape = 'u8[8192]{0}', space=vmem, size = 0x2000, scoped, tag = 'output window, operand 0, single buffered']
    %10 = vsyncpa [#allocation4], 0
    %11 = vsyncpa [#allocation7], 0
    %12 = vsyncpa [#allocation5], 0
    // Predicated region
    $region2: #{tpu_custom_call.1} parent=1 // pred_check
      _
    $region3: #{tpu_custom_call.1} parent=1 // pred_check_branch
      %14 = sbr.rel (0) target = $region5
    $region4: #{tpu_custom_call.1} parent=1 // pred_region
      %s16 = ssub.s32 256, 256
      %17 = vsyncadd [#allocation4], %s16
      %s18 = sshll.u32 [#allocation3], 4
      %s19 = int_to_ptr.vmem [resolvable:$true] %s18
      %24 = dma.hbm_to_vmem [thread:$0]  %s0, 256, %s19, [#allocation4], 128, 128, 8
    $region5: #{tpu_custom_call.1} parent=1 // pred_fallthru
      _
    // Predicated region
    $region6: #{tpu_custom_call.1} parent=1 // pred_check
      _
    $region7: #{tpu_custom_call.1} parent=1 // pred_check_branch
      %26 = sbr.rel (0) target = $region9
    $region8: #{tpu_custom_call.1} parent=1 // pred_region
      %s28 = ssub.s32 2048, 2048
      %29 = vsyncadd [#allocation7], %s28
      %s30 = sshll.u32 [#allocation6], 4
      %s31 = int_to_ptr.vmem [resolvable:$true] %s30
      %36 = dma.hbm_to_vmem [thread:$0]  %s1, 2048, %s31, [#allocation7], 128, 128, 8
    $region9: #{tpu_custom_call.1} parent=1 // pred_fallthru
      _
    // Predicated region
    $region10: #{tpu_custom_call.1} parent=1 // pred_check
      _
    $region11: #{tpu_custom_call.1} parent=1 // pred_check_branch
      %38 = sbr.rel (0) target = $region13
    $region12: #{tpu_custom_call.1} parent=1 // pred_region
      _
    $region13: #{tpu_custom_call.1} parent=1 // pred_fallthru
      _
    // Predicated region
    $region14: #{tpu_custom_call.1} parent=1 // pred_check
      _
    $region15: #{tpu_custom_call.1} parent=1 // pred_check_branch
      %40 = sbr.rel (0) target = $region17
    $region16: #{tpu_custom_call.1} parent=1 // pred_region
      %s42 = ssub.s32 2048, 2048
      %43 = vsyncadd [#allocation7], %s42
      %s44 = sshll.u32 [#allocation8], 4
      %s45 = int_to_ptr.vmem [resolvable:$true] %s44
      %50 = dma.hbm_to_vmem [thread:$0]  %s3, 2048, %s45, [#allocation7], 64, 64, 4
    $region17: #{tpu_custom_call.1} parent=1 // pred_fallthru
      _
    // Predicated region
    $region18: #{tpu_custom_call.1} parent=1 // pred_check
      _
    $region19: #{tpu_custom_call.1} parent=1 // pred_check_branch
      %52 = sbr.rel (0) target = $region21
    $region20: #{tpu_custom_call.1} parent=1 // pred_region
      _
    $region21: #{tpu_custom_call.1} parent=1 // pred_fallthru
      _
    // Predicated region
    $region22: #{tpu_custom_call.1} parent=1 // pred_check
      _
    $region23: #{tpu_custom_call.1} parent=1 // pred_check_branch
      %54 = sbr.rel (0) target = $region25
    $region24: #{tpu_custom_call.1} parent=1 // pred_region
      %55 = dma.done [#allocation4], 256
    $region25: #{tpu_custom_call.1} parent=1 // pred_fallthru
      _
    // Predicated region
    $region26: #{tpu_custom_call.1} parent=1 // pred_check
      _
    $region27: #{tpu_custom_call.1} parent=1 // pred_check_branch
      %57 = sbr.rel (0) target = $region29
    $region28: #{tpu_custom_call.1} parent=1 // pred_region
      %58 = dma.done [#allocation7], 2048
    $region29: #{tpu_custom_call.1} parent=1 // pred_fallthru
      _
    // Predicated region
    $region30: #{tpu_custom_call.1} parent=1 // pred_check
      _
    $region31: #{tpu_custom_call.1} parent=1 // pred_check_branch
      %60 = sbr.rel (0) target = $region33
    $region32: #{tpu_custom_call.1} parent=1 // pred_region
      %61 = dma.done [#allocation7], 2048
    $region33: #{tpu_custom_call.1} parent=1 // pred_fallthru
      _
    %p63 = scmp.eq.s32.totalorder 0, 0
    // Predicated region
    $region34: #{tpu_custom_call.1} parent=1 // pred_check
      %p64 = pneg %p63
    $region35: #{tpu_custom_call.1} parent=1 // pred_check_branch
      %66 = sbr.rel (%p64) target = $region37
    $region36: #{tpu_custom_call.1} parent=1 // pred_region
      %67 = vst [vmem:[#allocation2] sm:$0xff] 0.0
      %68 = vst [vmem:[#allocation2 + $0x8] sm:$0xff] 0.0
    $region37: #{tpu_custom_call.1} parent=1 // pred_fallthru
      _
    %v69 = vld [vmem:[#allocation3] sm:$0xff]
    %v70 = vld [vmem:[#allocation3 + $0x8] sm:$0xff]
    %v71 = vpack.c.bf16 %v70, %v69
    %v72 = vld [vmem:[#allocation6] sm:$0xff]
    %v73 = vld [vmem:[#allocation6 + $0x8] sm:$0xff]
    %v74 = vld [vmem:[#allocation6 + $0x10] sm:$0xff]
    %v75 = vld [vmem:[#allocation6 + $0x18] sm:$0xff]
    %v76 = vld [vmem:[#allocation6 + $0x20] sm:$0xff]
    %v77 = vld [vmem:[#allocation6 + $0x28] sm:$0xff]
    %v78 = vld [vmem:[#allocation6 + $0x30] sm:$0xff]
    %v79 = vld [vmem:[#allocation6 + $0x38] sm:$0xff]
    %v80 = vld [vmem:[#allocation6 + $0x40] sm:$0xff]
    %v81 = vld [vmem:[#allocation6 + $0x48] sm:$0xff]
    %v82 = vld [vmem:[#allocation6 + $0x50] sm:$0xff]
    %v83 = vld [vmem:[#allocation6 + $0x58] sm:$0xff]
    %v84 = vld [vmem:[#allocation6 + $0x60] sm:$0xff]
    %v85 = vld [vmem:[#allocation6 + $0x68] sm:$0xff]
    %v86 = vld [vmem:[#allocation6 + $0x70] sm:$0xff]
    %v87 = vld [vmem:[#allocation6 + $0x78] sm:$0xff]
    %v88 = vld [vmem:[%s2] sm:$0x3]
    %v90 = vlaneseq
    %v91 = vshrl.u32 %v90, 7
    %v92 = vsub.s32 0, %v91
    %v93 = vrot.slane %v88, %v92
    %v94 = vlaneseq
    %v95 = vshrl.u32 %v94, 7
    %v96 = vsub.s32 1, %v95
    %v97 = vrot.slane %v88, %v96
    %v116 = vunpack.c.l.b16 %v72
    %v117 = vunpack.c.h.b16 %v72
    %v118 = vunpack.c.l.b16 %v73
    %v119 = vunpack.c.h.b16 %v73
    %v120 = vunpack.c.l.b16 %v74
    %v121 = vunpack.c.h.b16 %v74
    %v122 = vunpack.c.l.b16 %v75
    %v123 = vunpack.c.h.b16 %v75
    %v124 = vunpack.c.l.b16 %v76
    %v125 = vunpack.c.h.b16 %v76
    %v126 = vunpack.c.l.b16 %v77
    %v127 = vunpack.c.h.b16 %v77
    %v128 = vunpack.c.l.b16 %v78
    %v129 = vunpack.c.h.b16 %v78
    %v130 = vunpack.c.l.b16 %v79
    %v131 = vunpack.c.h.b16 %v79
    %v132 = vunpack.c.l.b16 %v80
    %v133 = vunpack.c.h.b16 %v80
    %v134 = vunpack.c.l.b16 %v81
    %v135 = vunpack.c.h.b16 %v81
    %v136 = vunpack.c.l.b16 %v82
    %v137 = vunpack.c.h.b16 %v82
    %v138 = vunpack.c.l.b16 %v83
    %v139 = vunpack.c.h.b16 %v83
    %v140 = vunpack.c.l.b16 %v84
    %v141 = vunpack.c.h.b16 %v84
    %v142 = vunpack.c.l.b16 %v85
    %v143 = vunpack.c.h.b16 %v85
    %v144 = vunpack.c.l.b16 %v86
    %v145 = vunpack.c.h.b16 %v86
    %v146 = vunpack.c.l.b16 %v87
    %v147 = vunpack.c.h.b16 %v87
    %v148 = vpack.c.b16 %v118, %v116
    %v149 = vpack.c.b16 %v119, %v117
    %v150 = vpack.c.b16 %v122, %v120
    %v151 = vpack.c.b16 %v123, %v121
    %v152 = vpack.c.b16 %v126, %v124
    %v153 = vpack.c.b16 %v127, %v125
    %v154 = vpack.c.b16 %v130, %v128
    %v155 = vpack.c.b16 %v131, %v129
    %v156 = vpack.c.b16 %v134, %v132
    %v157 = vpack.c.b16 %v135, %v133
    %v158 = vpack.c.b16 %v138, %v136
    %v159 = vpack.c.b16 %v139, %v137
    %v160 = vpack.c.b16 %v142, %v140
    %v161 = vpack.c.b16 %v143, %v141
    %v162 = vpack.c.b16 %v146, %v144
    %v163 = vpack.c.b16 %v147, %v145
    %180 = vmatprep.subr.bf16.mxu0 %v149
    %181 = vmatpush1.bf16.msra.mxu0 %v148
    %182 = vmatprep.subr.bf16.mxu0 %v151
    %183 = vmatpush1.bf16.msra.mxu0 %v150
    %184 = vmatprep.subr.bf16.mxu0 %v153
    %185 = vmatpush1.bf16.msra.mxu0 %v152
    %186 = vmatprep.subr.bf16.mxu0 %v155
    %187 = vmatpush1.bf16.msra.mxu0 %v154
    %188 = vmatprep.subr.bf16.mxu0 %v157
    %189 = vmatpush1.bf16.msra.mxu0 %v156
    %190 = vmatprep.subr.bf16.mxu0 %v159
    %191 = vmatpush1.bf16.msra.mxu0 %v158
    %192 = vmatprep.subr.bf16.mxu0 %v161
    %193 = vmatpush1.bf16.msra.mxu0 %v160
    %194 = vmatprep.subr.bf16.mxu0 %v163
    %195 = vmatpush1.bf16.msra.mxu0 %v162
    %196 = vmatprep.subr.bf16.mxu0 0
    %197 = vmatpush1.bf16.msra.mxu0 0
    %198 = vmatprep.subr.bf16.mxu0 0
    %199 = vmatpush1.bf16.msra.mxu0 0
    %200 = vmatprep.subr.bf16.mxu0 0
    %201 = vmatpush1.bf16.msra.mxu0 0
    %202 = vmatprep.subr.bf16.mxu0 0
    %203 = vmatpush1.bf16.msra.mxu0 0
    %204 = vmatprep.subr.bf16.mxu0 0
    %205 = vmatpush1.bf16.msra.mxu0 0
    %206 = vmatprep.subr.bf16.mxu0 0
    %207 = vmatpush1.bf16.msra.mxu0 0
    %208 = vmatprep.subr.bf16.mxu0 0
    %209 = vmatpush1.bf16.msra.mxu0 0
    %210 = vmatprep.subr.bf16.mxu0 0
    %211 = vmatpush1.bf16.msra.mxu0 0
    %212 = vmatprep.mubr.bf16.mxu0 0
    %213 = vmatmul.mubr.bf16.gmra.mrb[0].mxu0 %v71
    %v214 = vpop.f32.mrb[0].mxu0
    %v215 = vadd.f32 %v93, %v214
    %v216 = vpop.f32.mrb[0].mxu0
    %v217 = vadd.f32 %v97, %v216
    %v218 = vpop.f32.mrb[0].mxu0
    %v219 = vadd.f32 %v93, %v218
    %v220 = vpop.f32.mrb[0].mxu0
    %v221 = vadd.f32 %v97, %v220
    %222 = vdwg.mxu0
    %v223 = vmax.f32 %v215, 0.0
    %v224 = vmax.f32 %v217, 0.0
    %v225 = vmax.f32 %v219, 0.0
    %v226 = vmax.f32 %v221, 0.0
    %v227 = vld [vmem:[#allocation2] sm:$0xff]
    %v228 = vld [vmem:[#allocation2 + $0x8] sm:$0xff]
    %v229 = vpack.c.bf16 %v225, %v223
    %v230 = vpack.c.bf16 %v226, %v224
    %v231 = vld [vmem:[#allocation8] sm:$0xf]
    %v232 = vld [vmem:[#allocation8 + $0x4] sm:$0xf]
    %v233 = vld [vmem:[#allocation8 + $0x8] sm:$0xf]
    %v234 = vld [vmem:[#allocation8 + $0xc] sm:$0xf]
    %v235 = vld [vmem:[#allocation8 + $0x10] sm:$0xf]
    %v236 = vld [vmem:[#allocation8 + $0x14] sm:$0xf]
    %v237 = vld [vmem:[#allocation8 + $0x18] sm:$0xf]
    %v238 = vld [vmem:[#allocation8 + $0x1c] sm:$0xf]
    %v239 = vld [vmem:[#allocation8 + $0x20] sm:$0xf]
    %v240 = vld [vmem:[#allocation8 + $0x24] sm:$0xf]
    %v241 = vld [vmem:[#allocation8 + $0x28] sm:$0xf]
    %v242 = vld [vmem:[#allocation8 + $0x2c] sm:$0xf]
    %v243 = vld [vmem:[#allocation8 + $0x30] sm:$0xf]
    %v244 = vld [vmem:[#allocation8 + $0x34] sm:$0xf]
    %v245 = vld [vmem:[#allocation8 + $0x38] sm:$0xf]
    %v246 = vld [vmem:[#allocation8 + $0x3c] sm:$0xf]
    %v247 = vld [vmem:[#allocation8 + $0x40] sm:$0xf]
    %v248 = vld [vmem:[#allocation8 + $0x44] sm:$0xf]
    %v249 = vld [vmem:[#allocation8 + $0x48] sm:$0xf]
    %v250 = vld [vmem:[#allocation8 + $0x4c] sm:$0xf]
    %v251 = vld [vmem:[#allocation8 + $0x50] sm:$0xf]
    %v252 = vld [vmem:[#allocation8 + $0x54] sm:$0xf]
    %v253 = vld [vmem:[#allocation8 + $0x58] sm:$0xf]
    %v254 = vld [vmem:[#allocation8 + $0x5c] sm:$0xf]
    %v255 = vld [vmem:[#allocation8 + $0x60] sm:$0xf]
    %v256 = vld [vmem:[#allocation8 + $0x64] sm:$0xf]
    %v257 = vld [vmem:[#allocation8 + $0x68] sm:$0xf]
    %v258 = vld [vmem:[#allocation8 + $0x6c] sm:$0xf]
    %v259 = vld [vmem:[#allocation8 + $0x70] sm:$0xf]
    %v260 = vld [vmem:[#allocation8 + $0x74] sm:$0xf]
    %v261 = vld [vmem:[#allocation8 + $0x78] sm:$0xf]
    %v262 = vld [vmem:[#allocation8 + $0x7c] sm:$0xf]
    %v295 = vunpack.c.l.b16 %v231
    %v296 = vunpack.c.l.b16 %v232
    %v297 = vunpack.c.l.b16 %v233
    %v298 = vunpack.c.l.b16 %v234
    %v299 = vunpack.c.l.b16 %v235
    %v300 = vunpack.c.l.b16 %v236
    %v301 = vunpack.c.l.b16 %v237
    %v302 = vunpack.c.l.b16 %v238
    %v303 = vunpack.c.l.b16 %v239
    %v304 = vunpack.c.l.b16 %v240
    %v305 = vunpack.c.l.b16 %v241
    %v306 = vunpack.c.l.b16 %v242
    %v307 = vunpack.c.l.b16 %v243
    %v308 = vunpack.c.l.b16 %v244
    %v309 = vunpack.c.l.b16 %v245
    %v310 = vunpack.c.l.b16 %v246
    %v311 = vunpack.c.l.b16 %v247
    %v312 = vunpack.c.l.b16 %v248
    %v313 = vunpack.c.l.b16 %v249
    %v314 = vunpack.c.l.b16 %v250
    %v315 = vunpack.c.l.b16 %v251
    %v316 = vunpack.c.l.b16 %v252
    %v317 = vunpack.c.l.b16 %v253
    %v318 = vunpack.c.l.b16 %v254
    %v319 = vunpack.c.l.b16 %v255
    %v320 = vunpack.c.l.b16 %v256
    %v321 = vunpack.c.l.b16 %v257
    %v322 = vunpack.c.l.b16 %v258
    %v323 = vunpack.c.l.b16 %v259
    %v324 = vunpack.c.l.b16 %v260
    %v325 = vunpack.c.l.b16 %v261
    %v326 = vunpack.c.l.b16 %v262
    %v327 = vpack.c.b16 %v296, %v295
    %v328 = vpack.c.b16 %v298, %v297
    %v329 = vpack.c.b16 %v300, %v299
    %v330 = vpack.c.b16 %v302, %v301
    %v331 = vpack.c.b16 %v304, %v303
    %v332 = vpack.c.b16 %v306, %v305
    %v333 = vpack.c.b16 %v308, %v307
    %v334 = vpack.c.b16 %v310, %v309
    %v335 = vpack.c.b16 %v312, %v311
    %v336 = vpack.c.b16 %v314, %v313
    %v337 = vpack.c.b16 %v316, %v315
    %v338 = vpack.c.b16 %v318, %v317
    %v339 = vpack.c.b16 %v320, %v319
    %v340 = vpack.c.b16 %v322, %v321
    %v341 = vpack.c.b16 %v324, %v323
    %v342 = vpack.c.b16 %v326, %v325
    %359 = vmatprep.subr.bf16.mxu0 0
    %360 = vmatpush1.bf16.msra.mxu0 %v327
    %361 = vmatprep.subr.bf16.mxu0 0
    %362 = vmatpush1.bf16.msra.mxu0 %v328
    %363 = vmatprep.subr.bf16.mxu0 0
    %364 = vmatpush1.bf16.msra.mxu0 %v329
    %365 = vmatprep.subr.bf16.mxu0 0
    %366 = vmatpush1.bf16.msra.mxu0 %v330
    %367 = vmatprep.subr.bf16.mxu0 0
    %368 = vmatpush1.bf16.msra.mxu0 %v331
    %369 = vmatprep.subr.bf16.mxu0 0
    %370 = vmatpush1.bf16.msra.mxu0 %v332
    %371 = vmatprep.subr.bf16.mxu0 0
    %372 = vmatpush1.bf16.msra.mxu0 %v333
    %373 = vmatprep.subr.bf16.mxu0 0
    %374 = vmatpush1.bf16.msra.mxu0 %v334
    %375 = vmatprep.subr.bf16.mxu0 0
    %376 = vmatpush1.bf16.msra.mxu0 %v335
    %377 = vmatprep.subr.bf16.mxu0 0
    %378 = vmatpush1.bf16.msra.mxu0 %v336
    %379 = vmatprep.subr.bf16.mxu0 0
    %380 = vmatpush1.bf16.msra.mxu0 %v337
    %381 = vmatprep.subr.bf16.mxu0 0
    %382 = vmatpush1.bf16.msra.mxu0 %v338
    %383 = vmatprep.subr.bf16.mxu0 0
    %384 = vmatpush1.bf16.msra.mxu0 %v339
    %385 = vmatprep.subr.bf16.mxu0 0
    %386 = vmatpush1.bf16.msra.mxu0 %v340
    %387 = vmatprep.subr.bf16.mxu0 0
    %388 = vmatpush1.bf16.msra.mxu0 %v341
    %389 = vmatprep.subr.bf16.mxu0 0
    %390 = vmatpush1.bf16.msra.mxu0 %v342
    %391 = vmatprep.mubr.bf16.mxu0 %v230
    %392 = vmatmul.mubr.bf16.gmra.mrb[0].mxu0 %v229
    %v393 = vpop.f32.mrb[0].mxu0
    %v394 = vadd.f32 0.0, %v393
    %v395 = vpop.f32.mrb[0].mxu0
    %v396 = vpop.f32.mrb[0].mxu0
    %v397 = vadd.f32 0.0, %v396
    %v398 = vpop.f32.mrb[0].mxu0
    %399 = vdwg.mxu0
    %v400 = vadd.f32 %v227, %v394
    %v401 = vadd.f32 %v228, %v397
    %402 = vst [vmem:[#allocation2] sm:$0xff] %v400
    %403 = vst [vmem:[#allocation2 + $0x8] sm:$0xff] %v401
    // Predicated region
    $region38: #{tpu_custom_call.1} parent=1 // pred_check
      %p404 = pneg %p63
    $region39: #{tpu_custom_call.1} parent=1 // pred_check_branch
      %406 = sbr.rel (%p404) target = $region41
    $region40: #{tpu_custom_call.1} parent=1 // pred_region
      %v407 = vld [vmem:[#allocation2] sm:$0xff]
      %v408 = vld [vmem:[#allocation2 + $0x8] sm:$0xff]
      %v409 = vld [vmem:[%s4] sm:$0x1]
      %v411 = vlaneseq
      %v412 = vshrl.u32 %v411, 7
      %v413 = vsub.s32 0, %v412
      %v414 = vrot.slane %v409, %v413
      %v416 = vadd.f32 %v407, %v414
      %v417 = vadd.f32 %v408, %v414
      %418 = vst [vmem:[#allocation9] sm:$0xff] %v416
      %419 = vst [vmem:[#allocation9 + $0x8] sm:$0xff] %v417
    $region41: #{tpu_custom_call.1} parent=1 // pred_fallthru
      _
    // Predicated region
    $region42: #{tpu_custom_call.1} parent=1 // pred_check
      _
    $region43: #{tpu_custom_call.1} parent=1 // pred_check_branch
      %421 = sbr.rel (0) target = $region45
    $region44: #{tpu_custom_call.1} parent=1 // pred_region
      %s423 = ssub.s32 256, 256
      %424 = vsyncadd [#allocation5], %s423
      %s425 = sshll.u32 [#allocation9], 4
      %s426 = int_to_ptr.vmem [resolvable:$true] %s425
      %431 = dma.vmem_to_hbm [thread:$0]  %s426, 256, %s5, [#allocation5], 128, 128, 8
    $region45: #{tpu_custom_call.1} parent=1 // pred_fallthru
      _
    // Predicated region
    $region46: #{tpu_custom_call.1} parent=1 // pred_check
      _
    $region47: #{tpu_custom_call.1} parent=1 // pred_check_branch
      %433 = sbr.rel (0) target = $region49
    $region48: #{tpu_custom_call.1} parent=1 // pred_region
      %434 = dma.done [#allocation5], 256
    $region49: #{tpu_custom_call.1} parent=1 // pred_fallthru
      _
    %435 = vsyncpa [#allocation4], 1
    %436 = vsyncpa [#allocation7], 1
    %437 = vsyncpa [#allocation5], 1

</llo_original>
